<compile_context>
chip_gen: v7x
topology: tpu7x:2x2x1
jax: 0.10.0
libtpu: 0.0.40
codegen_flags: <defaults>
</compile_context>

<pallas_src>
import functools

import jax
import jax.numpy as jnp
from jax.experimental import pallas as pl
from jax.experimental.pallas import tpu as pltpu

_H1 = 256   # hidden 1
_H2 = 128   # hidden 2
_OUT = 3    # logical output width


def _mlp_kernel(x_ref, w1_ref, b1_ref, w2_ref, b2_ref, w3_ref, b3_ref, o_ref):
    """Fused 3-layer MLP on one batch tile.

    x arrives in f32 and is cast to bf16 in vregs; matmuls run on the MXU with
    bf16 operands.  The bias+ReLU epilogue runs in the dtype of b1/b2 (bf16 on
    v6e/v7x, f32 on v5e).  The output store is the narrow (tile_b, 3) block.
    """
    epi_dt = b1_ref.dtype                                       # bf16 or f32
    x = x_ref[...].astype(jnp.bfloat16)                         # (tile_b, D)
    h1 = jnp.dot(x, w1_ref[...], preferred_element_type=epi_dt)
    h1 = jnp.maximum(h1 + b1_ref[...], 0).astype(jnp.bfloat16)  # (tile_b, 256)
    h2 = jnp.dot(h1, w2_ref[...], preferred_element_type=epi_dt)
    h2 = jnp.maximum(h2 + b2_ref[...], 0).astype(jnp.bfloat16)  # (tile_b, 128)
    out = jnp.dot(h2, w3_ref[...], preferred_element_type=jnp.float32)
    o_ref[...] = (out + b3_ref[...]).astype(o_ref.dtype)        # (tile_b, 3)


@functools.lru_cache(maxsize=None)
def _tpu_config():
    """(bf16_vpu, vmem_budget, vmem_cap, is_v7) from the local TPU generation."""
    try:
        kind = jax.devices()[0].device_kind.lower()
    except Exception:  # pragma: no cover - defensive default
        kind = ""
    is_v7 = "v7" in kind
    bf16_vpu = ("v6" in kind) or is_v7            # v5e VPU has no bf16 ops
    if is_v7:                                     # 64 MiB VMEM per TensorCore
        return bf16_vpu, 24 * 1024 * 1024, 48 * 1024 * 1024, True
    # v5e / v6e: 128 MiB VMEM per core -> allow bigger tiles.
    return bf16_vpu, 56 * 1024 * 1024, 100 * 1024 * 1024, False


def _vmem_estimate_bytes(tile_b, d):
    """Rough per-core VMEM footprint for the chosen tile size."""
    return (
        2 * tile_b * d * 4                                    # x tile, f32, dbl-buf
        + 2 * tile_b * _OUT * 4                               # out tile, f32, dbl-buf
        + tile_b * (_H1 + _H2) * (4 + 2)                      # h1/h2 intermediates
        + 2 * (d * _H1 + _H1 * _H2 + _H2 * _OUT) * 2 * 2      # bf16 weights, dbl-buf
        + 2 * (_H1 + _H2) * 2 * 2 + 2 * _OUT * 4 * 2          # biases, dbl-buf
    )


def prepare_params(params):
    """One-time parameter prep: bf16 weights, epilogue-dtype biases."""
    bf16_vpu, _, _, _ = _tpu_config()
    bias_dt = jnp.bfloat16 if bf16_vpu else jnp.float32
    return {
        "w1": params["w1"].astype(jnp.bfloat16),
        "b1": params["b1"].reshape(1, _H1).astype(bias_dt),
        "w2": params["w2"].astype(jnp.bfloat16),
        "b2": params["b2"].reshape(1, _H2).astype(bias_dt),
        "w3": params["w3"].astype(jnp.bfloat16),
        "b3": params["b3"].reshape(1, _OUT).astype(jnp.float32),
    }


@functools.partial(jax.jit, static_argnames=("tile_b",))
def decoder_net_forward(x, prepared, *, tile_b=2048):
    """Fused MLP forward. x: (N, D) float32 -> (N, 3) float32."""
    n, d = x.shape
    _, vmem_budget, vmem_cap, is_v7 = _tpu_config()

    # ---- batch-tile sizing (all static Python math) --------------------------
    tile_b = max(8, min(tile_b, pl.cdiv(n, 8) * 8))
    if is_v7 and n >= 16:
        # Ensure >=2 grid steps so the 'parallel' batch axis shards across both
        # TensorCores on v7x (single-TC chips are unaffected).
        tile_b = min(tile_b, pl.cdiv(pl.cdiv(n, 2), 8) * 8)
    while tile_b > 256 and _vmem_estimate_bytes(tile_b, d) > vmem_budget:
        tile_b = (tile_b // 2) // 8 * 8           # halve, keep sublane-multiple
    est = _vmem_estimate_bytes(tile_b, d)
    vmem_limit = int(min(vmem_cap, max(32 * 1024 * 1024, 2 * est)))

    grid = (pl.cdiv(n, tile_b),)

    w1, b1 = prepared["w1"], prepared["b1"]
    w2, b2 = prepared["w2"], prepared["b2"]
    w3, b3 = prepared["w3"], prepared["b3"]

    flops = 2 * n * (d * _H1 + _H1 * _H2 + _H2 * _OUT)
    bytes_accessed = (
        n * d * 4                                             # x read (f32)
        + (d * _H1 + _H1 * _H2 + _H2 * _OUT) * 2              # weights (bf16)
        + (_H1 + _H2) * b1.dtype.itemsize + _OUT * 4          # biases
        + n * _OUT * 4                                        # narrow output write
    )

    # TODO(synk): for feature_dim >~ 2K, add a K-reduction grid axis for layer 1
    # (f32 VMEM accumulator + pl.when init/finalize) instead of shrinking tile_b.
    return pl.pallas_call(
        _mlp_kernel,
        out_shape=jax.ShapeDtypeStruct((n, _OUT), jnp.float32),
        grid_spec=pltpu.PrefetchScalarGridSpec(
            num_scalar_prefetch=0,
            grid=grid,
            in_specs=[
                pl.BlockSpec((tile_b, d), lambda i: (i, 0)),      # x tile (f32)
                pl.BlockSpec((d, _H1), lambda i: (0, 0)),         # W1 (bf16)
                pl.BlockSpec((1, _H1), lambda i: (0, 0)),         # b1
                pl.BlockSpec((_H1, _H2), lambda i: (0, 0)),       # W2 (bf16)
                pl.BlockSpec((1, _H2), lambda i: (0, 0)),         # b2
                pl.BlockSpec((_H2, _OUT), lambda i: (0, 0)),      # W3 (bf16)
                pl.BlockSpec((1, _OUT), lambda i: (0, 0)),        # b3 (f32)
            ],
            out_specs=pl.BlockSpec((tile_b, _OUT), lambda i: (i, 0)),
        ),
        compiler_params=pltpu.CompilerParams(
            dimension_semantics=("parallel",),
            vmem_limit_bytes=vmem_limit,
        ),
        cost_estimate=pl.CostEstimate(
            flops=flops, transcendentals=0, bytes_accessed=bytes_accessed),
    )(x, w1, b1, w2, b2, w3, b3)


def init_params(key, feature_dim):
    """Deterministic synthetic init matching DecoderNet's layer shapes."""
    k1, k2, k3 = jax.random.split(key, 3)

    def linear_init(k, fan_in, fan_out):
        bound = 1.0 / jnp.sqrt(fan_in)            # torch.nn.Linear default-ish
        kw, kb = jax.random.split(k)
        w = jax.random.uniform(kw, (fan_in, fan_out), jnp.float32, -bound, bound)
        b = jax.random.uniform(kb, (1, fan_out), jnp.float32, -bound, bound)
        return w, b

    w1, b1 = linear_init(k1, feature_dim, _H1)
    w2, b2 = linear_init(k2, _H1, _H2)
    w3, b3 = linear_init(k3, _H2, _OUT)
    return {"w1": w1, "b1": b1, "w2": w2, "b2": b2, "w3": w3, "b3": b3}


def _reference(x, p):
    h1 = jnp.maximum(x @ p["w1"] + p["b1"], 0.0)
    h2 = jnp.maximum(h1 @ p["w2"] + p["b2"], 0.0)
    return h2 @ p["w3"] + p["b3"]


if __name__ == "__main__":
    key = jax.random.PRNGKey(0)
    kx, kp = jax.random.split(key)

    batch, feature_dim = 72, 32
    x = jax.random.normal(kx, (batch, feature_dim), jnp.float32)
    params = init_params(kp, feature_dim)
    prepared = prepare_params(params)
    ref = _reference(x, params)

    # Default tiling (single tile here; >=2 grid steps on v7x).
    out = jax.block_until_ready(decoder_net_forward(x, prepared))
    assert out.shape == (batch, _OUT), out.shape
    # bf16 matmul operands (f32 MXU accumulation) -> relaxed tolerance vs f32 ref.
    assert jnp.allclose(out, ref, atol=5e-2, rtol=5e-2), "mismatch (default tile)"

    # Multi-step grid with a ragged last block (72 = 2*32 + 8) to exercise the
    # pipelined path and out-of-bounds-row masking.
    out2 = jax.block_until_ready(decoder_net_forward(x, prepared, tile_b=32))
    assert out2.shape == (batch, _OUT), out2.shape
    assert jnp.allclose(out2, ref, atol=5e-2, rtol=5e-2), "mismatch (tiled/ragged)"

    print("KERNEL_OK")
</pallas_src>

<mosaic_0001>
module attributes {stable_mosaic.version = 11 : i64} {
  func.func @_mlp_kernel(%arg0: i32, %arg1: memref<72x32xf32, #tpu.memory_space<vmem>>, %arg2: memref<32x256xbf16, #tpu.memory_space<vmem>>, %arg3: memref<1x256xf32, #tpu.memory_space<vmem>>, %arg4: memref<256x128xbf16, #tpu.memory_space<vmem>>, %arg5: memref<1x128xf32, #tpu.memory_space<vmem>>, %arg6: memref<128x3xbf16, #tpu.memory_space<vmem>>, %arg7: memref<1x3xf32, #tpu.memory_space<vmem>>, %arg8: memref<72x3xf32, #tpu.memory_space<vmem>>) attributes {dimension_semantics = [#tpu.dimension_semantics<parallel>], iteration_bounds = array<i64: 1>, scalar_prefetch = 0 : i64, scratch_operands = 0 : i64, tpu.core_type = #tpu.core_type<tc>, window_params = [{transform_indices = @transform_0, window_bounds = array<i64: 72, 32>}, {pipeline_mode = #tpu.pipeline_mode<synchronous>, transform_indices = @transform_1, window_bounds = array<i64: 32, 256>}, {pipeline_mode = #tpu.pipeline_mode<synchronous>, transform_indices = @transform_2, window_bounds = array<i64: 1, 256>}, {pipeline_mode = #tpu.pipeline_mode<synchronous>, transform_indices = @transform_3, window_bounds = array<i64: 256, 128>}, {pipeline_mode = #tpu.pipeline_mode<synchronous>, transform_indices = @transform_4, window_bounds = array<i64: 1, 128>}, {pipeline_mode = #tpu.pipeline_mode<synchronous>, transform_indices = @transform_5, window_bounds = array<i64: 128, 3>}, {pipeline_mode = #tpu.pipeline_mode<synchronous>, transform_indices = @transform_6, window_bounds = array<i64: 1, 3>}, {transform_indices = @transform_7, window_bounds = array<i64: 72, 3>}]} {
    %c0 = arith.constant 0 : index
    %c0_0 = arith.constant 0 : index
    %0 = vector.load %arg1[%c0, %c0_0] : memref<72x32xf32, #tpu.memory_space<vmem>>, vector<72x32xf32>
    %1 = arith.truncf %0 : vector<72x32xf32> to vector<72x32xbf16>
    %c0_1 = arith.constant 0 : index
    %c0_2 = arith.constant 0 : index
    %2 = vector.load %arg2[%c0_1, %c0_2] : memref<32x256xbf16, #tpu.memory_space<vmem>>, vector<32x256xbf16>
    %cst = arith.constant dense<0.000000e+00> : vector<72x256xf32>
    %3 = tpu.matmul %1, %2, %cst {dimension_numbers = #tpu.dot_dimension_numbers<[1], [0], [0], [1], [0, 0, 1, 1], [], []>} : vector<72x32xbf16>, vector<32x256xbf16>, vector<72x256xf32> -> vector<72x256xf32>
    %c0_3 = arith.constant 0 : index
    %c0_4 = arith.constant 0 : index
    %4 = vector.load %arg3[%c0_3, %c0_4] : memref<1x256xf32, #tpu.memory_space<vmem>>, vector<1x256xf32>
    %5 = vector.broadcast %4 : vector<1x256xf32> to vector<72x256xf32>
    %6 = arith.addf %3, %5 : vector<72x256xf32>
    %cst_5 = arith.constant 0.000000e+00 : f32
    %7 = vector.broadcast %cst_5 : f32 to vector<72x256xf32>
    %8 = arith.maximumf %6, %7 : vector<72x256xf32>
    %9 = arith.truncf %8 : vector<72x256xf32> to vector<72x256xbf16>
    %c0_6 = arith.constant 0 : index
    %c0_7 = arith.constant 0 : index
    %10 = vector.load %arg4[%c0_6, %c0_7] : memref<256x128xbf16, #tpu.memory_space<vmem>>, vector<256x128xbf16>
    %cst_8 = arith.constant dense<0.000000e+00> : vector<72x128xf32>
    %11 = tpu.matmul %9, %10, %cst_8 {dimension_numbers = #tpu.dot_dimension_numbers<[1], [0], [0], [1], [0, 0, 1, 1], [], []>} : vector<72x256xbf16>, vector<256x128xbf16>, vector<72x128xf32> -> vector<72x128xf32>
    %c0_9 = arith.constant 0 : index
    %c0_10 = arith.constant 0 : index
    %12 = vector.load %arg5[%c0_9, %c0_10] : memref<1x128xf32, #tpu.memory_space<vmem>>, vector<1x128xf32>
    %13 = vector.broadcast %12 : vector<1x128xf32> to vector<72x128xf32>
    %14 = arith.addf %11, %13 : vector<72x128xf32>
    %cst_11 = arith.constant 0.000000e+00 : f32
    %15 = vector.broadcast %cst_11 : f32 to vector<72x128xf32>
    %16 = arith.maximumf %14, %15 : vector<72x128xf32>
    %17 = arith.truncf %16 : vector<72x128xf32> to vector<72x128xbf16>
    %c0_12 = arith.constant 0 : index
    %c0_13 = arith.constant 0 : index
    %18 = vector.load %arg6[%c0_12, %c0_13] : memref<128x3xbf16, #tpu.memory_space<vmem>>, vector<128x3xbf16>
    %cst_14 = arith.constant dense<0.000000e+00> : vector<72x3xf32>
    %19 = tpu.matmul %17, %18, %cst_14 {dimension_numbers = #tpu.dot_dimension_numbers<[1], [0], [0], [1], [0, 0, 1, 1], [], []>} : vector<72x128xbf16>, vector<128x3xbf16>, vector<72x3xf32> -> vector<72x3xf32>
    %c0_15 = arith.constant 0 : index
    %c0_16 = arith.constant 0 : index
    %20 = vector.load %arg7[%c0_15, %c0_16] : memref<1x3xf32, #tpu.memory_space<vmem>>, vector<1x3xf32>
    %21 = vector.broadcast %20 : vector<1x3xf32> to vector<72x3xf32>
    %22 = arith.addf %19, %21 : vector<72x3xf32>
    %c0_17 = arith.constant 0 : index
    %c0_18 = arith.constant 0 : index
    %23 = vector.load %arg8[%c0_17, %c0_18] : memref<72x3xf32, #tpu.memory_space<vmem>>, vector<72x3xf32>
    tpu.vector_store %arg8[%c0_17, %c0_18], %22 {strides = array<i32>} : memref<72x3xf32, #tpu.memory_space<vmem>>, vector<72x3xf32>,
    return
  }
  func.func @transform_0(%arg0: i32) -> (i32, i32) {
    %c0_i32 = arith.constant 0 : i32
    %c0_i32_0 = arith.constant 0 : i32
    return %arg0, %c0_i32 : i32, i32
  }
  func.func @transform_1(%arg0: i32) -> (i32, i32) {
    %c0_i32 = arith.constant 0 : i32
    %c0_i32_0 = arith.constant 0 : i32
    %c0_i32_1 = arith.constant 0 : i32
    return %c0_i32, %c0_i32_0 : i32, i32
  }
  func.func @transform_2(%arg0: i32) -> (i32, i32) {
    %c0_i32 = arith.constant 0 : i32
    %c0_i32_0 = arith.constant 0 : i32
    %c0_i32_1 = arith.constant 0 : i32
    return %c0_i32, %c0_i32_0 : i32, i32
  }
  func.func @transform_3(%arg0: i32) -> (i32, i32) {
    %c0_i32 = arith.constant 0 : i32
    %c0_i32_0 = arith.constant 0 : i32
    %c0_i32_1 = arith.constant 0 : i32
    return %c0_i32, %c0_i32_0 : i32, i32
  }
  func.func @transform_4(%arg0: i32) -> (i32, i32) {
    %c0_i32 = arith.constant 0 : i32
    %c0_i32_0 = arith.constant 0 : i32
    %c0_i32_1 = arith.constant 0 : i32
    return %c0_i32, %c0_i32_0 : i32, i32
  }
  func.func @transform_5(%arg0: i32) -> (i32, i32) {
    %c0_i32 = arith.constant 0 : i32
    %c0_i32_0 = arith.constant 0 : i32
    %c0_i32_1 = arith.constant 0 : i32
    return %c0_i32, %c0_i32_0 : i32, i32
  }
  func.func @transform_6(%arg0: i32) -> (i32, i32) {
    %c0_i32 = arith.constant 0 : i32
    %c0_i32_0 = arith.constant 0 : i32
    %c0_i32_1 = arith.constant 0 : i32
    return %c0_i32, %c0_i32_0 : i32, i32
  }
  func.func @transform_7(%arg0: i32) -> (i32, i32) {
    %c0_i32 = arith.constant 0 : i32
    %c0_i32_0 = arith.constant 0 : i32
    return %arg0, %c0_i32 : i32, i32
  }
}

</mosaic_0001>

<llo_original>
// kernel: decoder_net_forward.1
$region0: #{decoder_net_forward.1}
  #allocation0 [shape = 'u32[]', space=smem, size = 0x4, offset = 0x4, fixed_abs, tag = 'smem constant byte address 0x4 - core index']
  #allocation1 [shape = 'u32[144,128]{1,0:T(1,128)}', space=vmem, size = 0x12000, scoped, tag = 'internal scratch']
  %s0 = inlined_call_operand.vmem [shape: f32[72,32], index: 0, kind: input, shape index: {}]
  %s1 = inlined_call_operand.vmem [shape: bf16[32,256], index: 1, kind: input, shape index: {}]
  %s2 = inlined_call_operand.vmem [shape: f32[1,256], index: 2, kind: input, shape index: {}]
  %s3 = inlined_call_operand.vmem [shape: bf16[256,128], index: 3, kind: input, shape index: {}]
  %s4 = inlined_call_operand.vmem [shape: f32[1,128], index: 4, kind: input, shape index: {}]
  %s5 = inlined_call_operand.vmem [shape: bf16[128,3], index: 5, kind: input, shape index: {}]
  %s6 = inlined_call_operand.vmem [shape: f32[1,3], index: 6, kind: input, shape index: {}]
  %s7 = inlined_call_operand.vmem [shape: f32[72,3], index: 7, kind: output, shape index: {}]
  %s8 = sld [smem:[#allocation0]]
  $region38: #{decoder_net_forward.1} parent=0
    _
  %s10 = ssub.s32 1, %s8
  %s11 = scalar_select 0, %s10, %s8
  // Predicated region
  $region2: #{decoder_net_forward.1} parent=0 // pred_check
    _
  $region3: #{decoder_net_forward.1} parent=0 // pred_check_branch
    %13 = sbr.rel (0) target = $region5
  $region4: #{decoder_net_forward.1} parent=0 // pred_region
    _
  $region5: #{decoder_net_forward.1} parent=0 // pred_fallthru
    _
  // Predicated region
  $region6: #{decoder_net_forward.1} parent=0 // pred_check
    _
  $region7: #{decoder_net_forward.1} parent=0 // pred_check_branch
    %15 = sbr.rel (0) target = $region9
  $region8: #{decoder_net_forward.1} parent=0 // pred_region
    _
  $region9: #{decoder_net_forward.1} parent=0 // pred_fallthru
    _
  // Predicated region
  $region10: #{decoder_net_forward.1} parent=0 // pred_check
    _
  $region11: #{decoder_net_forward.1} parent=0 // pred_check_branch
    %17 = sbr.rel (0) target = $region13
  $region12: #{decoder_net_forward.1} parent=0 // pred_region
    _
  $region13: #{decoder_net_forward.1} parent=0 // pred_fallthru
    _
  // Predicated region
  $region14: #{decoder_net_forward.1} parent=0 // pred_check
    _
  $region15: #{decoder_net_forward.1} parent=0 // pred_check_branch
    %19 = sbr.rel (0) target = $region17
  $region16: #{decoder_net_forward.1} parent=0 // pred_region
    _
  $region17: #{decoder_net_forward.1} parent=0 // pred_fallthru
    _
  // Predicated region
  $region18: #{decoder_net_forward.1} parent=0 // pred_check
    _
  $region19: #{decoder_net_forward.1} parent=0 // pred_check_branch
    %21 = sbr.rel (0) target = $region21
  $region20: #{decoder_net_forward.1} parent=0 // pred_region
    _
  $region21: #{decoder_net_forward.1} parent=0 // pred_fallthru
    _
  // Predicated region
  $region22: #{decoder_net_forward.1} parent=0 // pred_check
    _
  $region23: #{decoder_net_forward.1} parent=0 // pred_check_branch
    %23 = sbr.rel (0) target = $region25
  $region24: #{decoder_net_forward.1} parent=0 // pred_region
    _
  $region25: #{decoder_net_forward.1} parent=0 // pred_fallthru
    _
  // Predicated region
  $region26: #{decoder_net_forward.1} parent=0 // pred_check
    _
  $region27: #{decoder_net_forward.1} parent=0 // pred_check_branch
    %25 = sbr.rel (0) target = $region29
  $region28: #{decoder_net_forward.1} parent=0 // pred_region
    _
  $region29: #{decoder_net_forward.1} parent=0 // pred_fallthru
    _
  %v27 = vld [vmem:[%s0] sm:$0xff]
  %v28 = vld [vmem:[%s0 + $0x8] sm:$0xff]
  %v29 = vld [vmem:[%s0 + $0x10] sm:$0xff]
  %v30 = vld [vmem:[%s0 + $0x18] sm:$0xff]
  %v31 = vld [vmem:[%s0 + $0x20] sm:$0xff]
  %v32 = vld [vmem:[%s0 + $0x28] sm:$0xff]
  %v33 = vld [vmem:[%s0 + $0x30] sm:$0xff]
  %v34 = vld [vmem:[%s0 + $0x38] sm:$0xff]
  %v35 = vld [vmem:[%s0 + $0x40] sm:$0xff]
  %v36 = vpack.c.bf16 %v28, %v27
  %v37 = vpack.c.bf16 %v30, %v29
  %v38 = vpack.c.bf16 %v32, %v31
  %v39 = vpack.c.bf16 %v34, %v33
  %v40 = vpack.c.bf16 %v35, %v35
  %v41 = vld [vmem:[%s1] sm:$0xff]
  %v42 = vld [vmem:[%s1 + $0x8] sm:$0xff]
  %v43 = vld [vmem:[%s1 + $0x10] sm:$0xff]
  %v44 = vld [vmem:[%s1 + $0x18] sm:$0xff]
  %v45 = vld [vmem:[%s2] sm:$0x3]
  %v47 = vlaneseq
  %v48 = vshrl.u32 %v47, 7
  %v49 = vsub.s32 0, %v48
  %v50 = vrot.slane %v45, %v49
  %v51 = vlaneseq
  %v52 = vshrl.u32 %v51, 7
  %v53 = vsub.s32 1, %v52
  %v54 = vrot.slane %v45, %v53
  %v61 = vunpack.c.l.b16 %v41
  %v62 = vunpack.c.h.b16 %v41
  %v63 = vunpack.c.l.b16 %v42
  %v64 = vunpack.c.h.b16 %v42
  %v65 = vunpack.c.l.b16 %v43
  %v66 = vunpack.c.h.b16 %v43
  %v67 = vunpack.c.l.b16 %v44
  %v68 = vunpack.c.h.b16 %v44
  %v69 = vpack.c.b16 %v63, %v61
  %v70 = vpack.c.b16 %v64, %v62
  %v71 = vpack.c.b16 %v67, %v65
  %v72 = vpack.c.b16 %v68, %v66
  %vm77 = vcmask 261120
  %v79 = vsel %vm77, %v36, 0
  %v82 = vsel %vm77, %v37, 0
  %v85 = vsel %vm77, %v38, 0
  %v88 = vsel %vm77, %v39, 0
  %v91 = vsel %vm77, %v40, 0
  %93 = vmatprep.subr.bf16.mxu0 %v70
  %94 = vmatpush1.bf16.msra.mxu0 %v69
  %95 = vmatprep.subr.bf16.mxu0 %v72
  %96 = vmatpush1.bf16.msra.mxu0 %v71
  %97 = vmatprep.subr.bf16.mxu0 0
  %98 = vmatpush1.bf16.msra.mxu0 0
  %99 = vmatprep.subr.bf16.mxu0 0
  %100 = vmatpush1.bf16.msra.mxu0 0
  %101 = vmatprep.subr.bf16.mxu0 0
  %102 = vmatpush1.bf16.msra.mxu0 0
  %103 = vmatprep.subr.bf16.mxu0 0
  %104 = vmatpush1.bf16.msra.mxu0 0
  %105 = vmatprep.subr.bf16.mxu0 0
  %106 = vmatpush1.bf16.msra.mxu0 0
  %107 = vmatprep.subr.bf16.mxu0 0
  %108 = vmatpush1.bf16.msra.mxu0 0
  %109 = vmatprep.subr.bf16.mxu0 0
  %110 = vmatpush1.bf16.msra.mxu0 0
  %111 = vmatprep.subr.bf16.mxu0 0
  %112 = vmatpush1.bf16.msra.mxu0 0
  %113 = vmatprep.subr.bf16.mxu0 0
  %114 = vmatpush1.bf16.msra.mxu0 0
  %115 = vmatprep.subr.bf16.mxu0 0
  %116 = vmatpush1.bf16.msra.mxu0 0
  %117 = vmatprep.subr.bf16.mxu0 0
  %118 = vmatpush1.bf16.msra.mxu0 0
  %119 = vmatprep.subr.bf16.mxu0 0
  %120 = vmatpush1.bf16.msra.mxu0 0
  %121 = vmatprep.subr.bf16.mxu0 0
  %122 = vmatpush1.bf16.msra.mxu0 0
  %123 = vmatprep.subr.bf16.mxu0 0
  %124 = vmatpush1.bf16.msra.mxu0 0
  %125 = vmatprep.mubr.bf16.mxu0 0
  %126 = vmatmul.mubr.bf16.gmra.mrb[0].mxu0 %v79
  %v127 = vpop.f32.mrb[0].mxu0
  %v128 = vadd.f32 %v50, %v127
  %v129 = vpop.f32.mrb[0].mxu0
  %v130 = vadd.f32 %v54, %v129
  %v131 = vpop.f32.mrb[0].mxu0
  %v132 = vadd.f32 %v50, %v131
  %v133 = vpop.f32.mrb[0].mxu0
  %v134 = vadd.f32 %v54, %v133
  %135 = vmatprep.mubr.bf16.mxu0 0
  %136 = vmatmul.mubr.bf16.gmra.mrb[0].mxu0 %v82
  %v137 = vpop.f32.mrb[0].mxu0
  %v138 = vadd.f32 %v50, %v137
  %v139 = vpop.f32.mrb[0].mxu0
  %v140 = vadd.f32 %v54, %v139
  %v141 = vpop.f32.mrb[0].mxu0
  %v142 = vadd.f32 %v50, %v141
  %v143 = vpop.f32.mrb[0].mxu0
  %v144 = vadd.f32 %v54, %v143
  %145 = vmatprep.mubr.bf16.mxu0 0
  %146 = vmatmul.mubr.bf16.gmra.mrb[0].mxu0 %v85
  %v147 = vpop.f32.mrb[0].mxu0
  %v148 = vadd.f32 %v50, %v147
  %v149 = vpop.f32.mrb[0].mxu0
  %v150 = vadd.f32 %v54, %v149
  %v151 = vpop.f32.mrb[0].mxu0
  %v152 = vadd.f32 %v50, %v151
  %v153 = vpop.f32.mrb[0].mxu0
  %v154 = vadd.f32 %v54, %v153
  %155 = vmatprep.mubr.bf16.mxu0 0
  %156 = vmatmul.mubr.bf16.gmra.mrb[0].mxu0 %v88
  %v157 = vpop.f32.mrb[0].mxu0
  %v158 = vadd.f32 %v50, %v157
  %v159 = vpop.f32.mrb[0].mxu0
  %v160 = vadd.f32 %v54, %v159
  %v161 = vpop.f32.mrb[0].mxu0
  %v162 = vadd.f32 %v50, %v161
  %v163 = vpop.f32.mrb[0].mxu0
  %v164 = vadd.f32 %v54, %v163
  %165 = vmatprep.mubr.bf16.mxu0 0
  %166 = vmatmul.mubr.bf16.gmra.mrb[0].mxu0 %v91
  %v167 = vpop.f32.mrb[0].mxu0
  %v168 = vadd.f32 %v50, %v167
  %v169 = vpop.f32.mrb[0].mxu0
  %v170 = vadd.f32 %v54, %v169
  %v171 = vpop.f32.mrb[0].mxu0
  %v172 = vpop.f32.mrb[0].mxu0
  %173 = vdwg.mxu0
  %v174 = vmax.f32 %v128, 0.0
  %v175 = vmax.f32 %v130, 0.0
  %v176 = vmax.f32 %v132, 0.0
  %v177 = vmax.f32 %v134, 0.0
  %v178 = vmax.f32 %v138, 0.0
  %v179 = vmax.f32 %v140, 0.0
  %v180 = vmax.f32 %v142, 0.0
  %v181 = vmax.f32 %v144, 0.0
  %v182 = vmax.f32 %v148, 0.0
  %v183 = vmax.f32 %v150, 0.0
  %v184 = vmax.f32 %v152, 0.0
  %v185 = vmax.f32 %v154, 0.0
  %v186 = vmax.f32 %v158, 0.0
  %v187 = vmax.f32 %v160, 0.0
  %v188 = vmax.f32 %v162, 0.0
  %v189 = vmax.f32 %v164, 0.0
  %v190 = vmax.f32 %v168, 0.0
  %v191 = vmax.f32 %v170, 0.0
  %v192 = vpack.c.bf16 %v176, %v174
  %v193 = vpack.c.bf16 %v177, %v175
  %v194 = vpack.c.bf16 %v180, %v178
  %v195 = vpack.c.bf16 %v181, %v179
  %v196 = vpack.c.bf16 %v184, %v182
  %v197 = vpack.c.bf16 %v185, %v183
  %v198 = vpack.c.bf16 %v188, %v186
  %v199 = vpack.c.bf16 %v189, %v187
  %v200 = vpack.c.bf16 %v190, %v190
  %v201 = vpack.c.bf16 %v191, %v191
  %v202 = vld [vmem:[%s3] sm:$0xf]
  %v203 = vld [vmem:[%s3 + $0x4] sm:$0xf]
  %v204 = vld [vmem:[%s3 + $0x8] sm:$0xf]
  %v205 = vld [vmem:[%s3 + $0xc] sm:$0xf]
  %v206 = vld [vmem:[%s3 + $0x10] sm:$0xf]
  %v207 = vld [vmem:[%s3 + $0x14] sm:$0xf]
  %v208 = vld [vmem:[%s3 + $0x18] sm:$0xf]
  %v209 = vld [vmem:[%s3 + $0x1c] sm:$0xf]
  %v210 = vld [vmem:[%s3 + $0x20] sm:$0xf]
  %v211 = vld [vmem:[%s3 + $0x24] sm:$0xf]
  %v212 = vld [vmem:[%s3 + $0x28] sm:$0xf]
  %v213 = vld [vmem:[%s3 + $0x2c] sm:$0xf]
  %v214 = vld [vmem:[%s3 + $0x30] sm:$0xf]
  %v215 = vld [vmem:[%s3 + $0x34] sm:$0xf]
  %v216 = vld [vmem:[%s3 + $0x38] sm:$0xf]
  %v217 = vld [vmem:[%s3 + $0x3c] sm:$0xf]
  %v218 = vld [vmem:[%s3 + $0x40] sm:$0xf]
  %v219 = vld [vmem:[%s3 + $0x44] sm:$0xf]
  %v220 = vld [vmem:[%s3 + $0x48] sm:$0xf]
  %v221 = vld [vmem:[%s3 + $0x4c] sm:$0xf]
  %v222 = vld [vmem:[%s3 + $0x50] sm:$0xf]
  %v223 = vld [vmem:[%s3 + $0x54] sm:$0xf]
  %v224 = vld [vmem:[%s3 + $0x58] sm:$0xf]
  %v225 = vld [vmem:[%s3 + $0x5c] sm:$0xf]
  %v226 = vld [vmem:[%s3 + $0x60] sm:$0xf]
  %v227 = vld [vmem:[%s3 + $0x64] sm:$0xf]
  %v228 = vld [vmem:[%s3 + $0x68] sm:$0xf]
  %v229 = vld [vmem:[%s3 + $0x6c] sm:$0xf]
  %v230 = vld [vmem:[%s3 + $0x70] sm:$0xf]
  %v231 = vld [vmem:[%s3 + $0x74] sm:$0xf]
  %v232 = vld [vmem:[%s3 + $0x78] sm:$0xf]
  %v233 = vld [vmem:[%s3 + $0x7c] sm:$0xf]
  %v234 = vld [vmem:[%s4] sm:$0x1]
  %v236 = vlaneseq
  %v237 = vshrl.u32 %v236, 7
  %v238 = vsub.s32 0, %v237
  %v239 = vrot.slane %v234, %v238
  %v273 = vunpack.c.l.b16 %v202
  %v274 = vunpack.c.l.b16 %v203
  %v275 = vunpack.c.l.b16 %v204
  %v276 = vunpack.c.l.b16 %v205
  %v277 = vunpack.c.l.b16 %v206
  %v278 = vunpack.c.l.b16 %v207
  %v279 = vunpack.c.l.b16 %v208
  %v280 = vunpack.c.l.b16 %v209
  %v281 = vunpack.c.l.b16 %v210
  %v282 = vunpack.c.l.b16 %v211
  %v283 = vunpack.c.l.b16 %v212
  %v284 = vunpack.c.l.b16 %v213
  %v285 = vunpack.c.l.b16 %v214
  %v286 = vunpack.c.l.b16 %v215
  %v287 = vunpack.c.l.b16 %v216
  %v288 = vunpack.c.l.b16 %v217
  %v289 = vunpack.c.l.b16 %v218
  %v290 = vunpack.c.l.b16 %v219
  %v291 = vunpack.c.l.b16 %v220
  %v292 = vunpack.c.l.b16 %v221
  %v293 = vunpack.c.l.b16 %v222
  %v294 = vunpack.c.l.b16 %v223
  %v295 = vunpack.c.l.b16 %v224
  %v296 = vunpack.c.l.b16 %v225
  %v297 = vunpack.c.l.b16 %v226
  %v298 = vunpack.c.l.b16 %v227
  %v299 = vunpack.c.l.b16 %v228
  %v300 = vunpack.c.l.b16 %v229
  %v301 = vunpack.c.l.b16 %v230
  %v302 = vunpack.c.l.b16 %v231
  %v303 = vunpack.c.l.b16 %v232
  %v304 = vunpack.c.l.b16 %v233
  %v305 = vpack.c.b16 %v274, %v273
  %v306 = vpack.c.b16 %v276, %v275
  %v307 = vpack.c.b16 %v278, %v277
  %v308 = vpack.c.b16 %v280, %v279
  %v309 = vpack.c.b16 %v282, %v281
  %v310 = vpack.c.b16 %v284, %v283
  %v311 = vpack.c.b16 %v286, %v285
  %v312 = vpack.c.b16 %v288, %v287
  %v313 = vpack.c.b16 %v290, %v289
  %v314 = vpack.c.b16 %v292, %v291
  %v315 = vpack.c.b16 %v294, %v293
  %v316 = vpack.c.b16 %v296, %v295
  %v317 = vpack.c.b16 %v298, %v297
  %v318 = vpack.c.b16 %v300, %v299
  %v319 = vpack.c.b16 %v302, %v301
  %v320 = vpack.c.b16 %v304, %v303
  %337 = vmatprep.subr.bf16.mxu0 0
  %338 = vmatpush1.bf16.msra.mxu0 %v305
  %339 = vmatprep.subr.bf16.mxu0 0
  %340 = vmatpush1.bf16.msra.mxu0 %v306
  %341 = vmatprep.subr.bf16.mxu0 0
  %342 = vmatpush1.bf16.msra.mxu0 %v307
  %343 = vmatprep.subr.bf16.mxu0 0
  %344 = vmatpush1.bf16.msra.mxu0 %v308
  %345 = vmatprep.subr.bf16.mxu0 0
  %346 = vmatpush1.bf16.msra.mxu0 %v309
  %347 = vmatprep.subr.bf16.mxu0 0
  %348 = vmatpush1.bf16.msra.mxu0 %v310
  %349 = vmatprep.subr.bf16.mxu0 0
  %350 = vmatpush1.bf16.msra.mxu0 %v311
  %351 = vmatprep.subr.bf16.mxu0 0
  %352 = vmatpush1.bf16.msra.mxu0 %v312
  %353 = vmatprep.subr.bf16.mxu0 0
  %354 = vmatpush1.bf16.msra.mxu0 %v313
  %355 = vmatprep.subr.bf16.mxu0 0
  %356 = vmatpush1.bf16.msra.mxu0 %v314
  %357 = vmatprep.subr.bf16.mxu0 0
  %358 = vmatpush1.bf16.msra.mxu0 %v315
  %359 = vmatprep.subr.bf16.mxu0 0
  %360 = vmatpush1.bf16.msra.mxu0 %v316
  %361 = vmatprep.subr.bf16.mxu0 0
  %362 = vmatpush1.bf16.msra.mxu0 %v317
  %363 = vmatprep.subr.bf16.mxu0 0
  %364 = vmatpush1.bf16.msra.mxu0 %v318
  %365 = vmatprep.subr.bf16.mxu0 0
  %366 = vmatpush1.bf16.msra.mxu0 %v319
  %367 = vmatprep.subr.bf16.mxu0 0
  %368 = vmatpush1.bf16.msra.mxu0 %v320
  %369 = vmatprep.mubr.bf16.mxu0 %v193
  %370 = vmatmul.mubr.bf16.gmra.mrb[0].mxu0 %v192
  %v371 = vpop.f32.mrb[0].mxu0
  %v372 = vadd.f32 %v239, %v371
  %v373 = vpop.f32.mrb[0].mxu0
  %v374 = vpop.f32.mrb[0].mxu0
  %v375 = vadd.f32 %v239, %v374
  %v376 = vpop.f32.mrb[0].mxu0
  %377 = vmatprep.mubr.bf16.mxu0 %v195
  %378 = vmatmul.mubr.bf16.gmra.mrb[0].mxu0 %v194
  %v379 = vpop.f32.mrb[0].mxu0
  %v380 = vadd.f32 %v239, %v379
  %v381 = vpop.f32.mrb[0].mxu0
  %v382 = vpop.f32.mrb[0].mxu0
  %v383 = vadd.f32 %v239, %v382
  %v384 = vpop.f32.mrb[0].mxu0
  %385 = vmatprep.mubr.bf16.mxu0 %v197
  %386 = vmatmul.mubr.bf16.gmra.mrb[0].mxu0 %v196
  %v387 = vpop.f32.mrb[0].mxu0
  %v388 = vadd.f32 %v239, %v387
  %v389 = vpop.f32.mrb[0].mxu0
  %v390 = vpop.f32.mrb[0].mxu0
  %v391 = vadd.f32 %v239, %v390
  %v392 = vpop.f32.mrb[0].mxu0
  %393 = vmatprep.mubr.bf16.mxu0 %v199
  %394 = vmatmul.mubr.bf16.gmra.mrb[0].mxu0 %v198
  %v395 = vpop.f32.mrb[0].mxu0
  %v396 = vadd.f32 %v239, %v395
  %v397 = vpop.f32.mrb[0].mxu0
  %v398 = vpop.f32.mrb[0].mxu0
  %v399 = vadd.f32 %v239, %v398
  %v400 = vpop.f32.mrb[0].mxu0
  %401 = vmatprep.mubr.bf16.mxu0 %v201
  %402 = vmatmul.mubr.bf16.gmra.mrb[0].mxu0 %v200
  %v403 = vpop.f32.mrb[0].mxu0
  %v404 = vadd.f32 %v239, %v403
  %v405 = vpop.f32.mrb[0].mxu0
  %v406 = vpop.f32.mrb[0].mxu0
  %v407 = vpop.f32.mrb[0].mxu0
  %408 = vdwg.mxu0
  %v409 = vmax.f32 %v372, 0.0
  %v410 = vmax.f32 %v375, 0.0
  %v411 = vmax.f32 %v380, 0.0
  %v412 = vmax.f32 %v383, 0.0
  %v413 = vmax.f32 %v388, 0.0
  %v414 = vmax.f32 %v391, 0.0
  %v415 = vmax.f32 %v396, 0.0
  %v416 = vmax.f32 %v399, 0.0
  %v417 = vmax.f32 %v404, 0.0
  %v418 = vpack.c.bf16 %v410, %v409
  %v419 = vpack.c.bf16 %v412, %v411
  %v420 = vpack.c.bf16 %v414, %v413
  %v421 = vpack.c.bf16 %v416, %v415
  %v422 = vpack.c.bf16 %v417, %v417
  %v423 = vld [vmem:[%s5] sm:$0xf]
  %v424 = vld [vmem:[%s5 + $0x4] sm:$0xf]
  %v425 = vld [vmem:[%s5 + $0x8] sm:$0xf]
  %v426 = vld [vmem:[%s5 + $0xc] sm:$0xf]
  %v427 = vld [vmem:[%s5 + $0x10] sm:$0xf]
  %v428 = vld [vmem:[%s5 + $0x14] sm:$0xf]
  %v429 = vld [vmem:[%s5 + $0x18] sm:$0xf]
  %v430 = vld [vmem:[%s5 + $0x1c] sm:$0xf]
  %v431 = vld [vmem:[%s5 + $0x20] sm:$0xf]
  %v432 = vld [vmem:[%s5 + $0x24] sm:$0xf]
  %v433 = vld [vmem:[%s5 + $0x28] sm:$0xf]
  %v434 = vld [vmem:[%s5 + $0x2c] sm:$0xf]
  %v435 = vld [vmem:[%s5 + $0x30] sm:$0xf]
  %v436 = vld [vmem:[%s5 + $0x34] sm:$0xf]
  %v437 = vld [vmem:[%s5 + $0x38] sm:$0xf]
  %v438 = vld [vmem:[%s5 + $0x3c] sm:$0xf]
  %v439 = vld [vmem:[%s6] sm:$0x1]
  %v441 = vlaneseq
  %v442 = vshrl.u32 %v441, 7
  %v443 = vsub.s32 0, %v442
  %v444 = vrot.slane %v439, %v443
  %v462 = vunpack.c.l.b16 %v423
  %v463 = vunpack.c.l.b16 %v424
  %v464 = vunpack.c.l.b16 %v425
  %v465 = vunpack.c.l.b16 %v426
  %v466 = vunpack.c.l.b16 %v427
  %v467 = vunpack.c.l.b16 %v428
  %v468 = vunpack.c.l.b16 %v429
  %v469 = vunpack.c.l.b16 %v430
  %v470 = vunpack.c.l.b16 %v431
  %v471 = vunpack.c.l.b16 %v432
  %v472 = vunpack.c.l.b16 %v433
  %v473 = vunpack.c.l.b16 %v434
  %v474 = vunpack.c.l.b16 %v435
  %v475 = vunpack.c.l.b16 %v436
  %v476 = vunpack.c.l.b16 %v437
  %v477 = vunpack.c.l.b16 %v438
  %v478 = vpack.c.b16 %v463, %v462
  %v479 = vpack.c.b16 %v465, %v464
  %v480 = vpack.c.b16 %v467, %v466
  %v481 = vpack.c.b16 %v469, %v468
  %v482 = vpack.c.b16 %v471, %v470
  %v483 = vpack.c.b16 %v473, %v472
  %v484 = vpack.c.b16 %v475, %v474
  %v485 = vpack.c.b16 %v477, %v476
  %494 = vmatprep.subr.bf16.mxu0 0
  %495 = vmatpush1.bf16.msra.mxu0 %v478
  %496 = vmatprep.subr.bf16.mxu0 0
  %497 = vmatpush1.bf16.msra.mxu0 %v479
  %498 = vmatprep.subr.bf16.mxu0 0
  %499 = vmatpush1.bf16.msra.mxu0 %v480
  %500 = vmatprep.subr.bf16.mxu0 0
  %501 = vmatpush1.bf16.msra.mxu0 %v481
  %502 = vmatprep.subr.bf16.mxu0 0
  %503 = vmatpush1.bf16.msra.mxu0 %v482
  %504 = vmatprep.subr.bf16.mxu0 0
  %505 = vmatpush1.bf16.msra.mxu0 %v483
  %506 = vmatprep.subr.bf16.mxu0 0
  %507 = vmatpush1.bf16.msra.mxu0 %v484
  %508 = vmatprep.subr.bf16.mxu0 0
  %509 = vmatpush1.bf16.msra.mxu0 %v485
  %510 = vmatprep.subr.bf16.mxu0 0
  %511 = vmatpush1.bf16.msra.mxu0 0
  %512 = vmatprep.subr.bf16.mxu0 0
  %513 = vmatpush1.bf16.msra.mxu0 0
  %514 = vmatprep.subr.bf16.mxu0 0
  %515 = vmatpush1.bf16.msra.mxu0 0
  %516 = vmatprep.subr.bf16.mxu0 0
  %517 = vmatpush1.bf16.msra.mxu0 0
  %518 = vmatprep.subr.bf16.mxu0 0
  %519 = vmatpush1.bf16.msra.mxu0 0
  %520 = vmatprep.subr.bf16.mxu0 0
  %521 = vmatpush1.bf16.msra.mxu0 0
  %522 = vmatprep.subr.bf16.mxu0 0
  %523 = vmatpush1.bf16.msra.mxu0 0
  %524 = vmatprep.subr.bf16.mxu0 0
  %525 = vmatpush1.bf16.msra.mxu0 0
  %526 = vmatprep.mubr.bf16.mxu0 0
  %527 = vmatmul.mubr.bf16.gmra.mrb[0].mxu0 %v418
  %v528 = vpop.f32.mrb[0].mxu0
  %v529 = vadd.f32 %v444, %v528
  %v530 = vpop.f32.mrb[0].mxu0
  %v531 = vpop.f32.mrb[0].mxu0
  %v532 = vadd.f32 %v444, %v531
  %v533 = vpop.f32.mrb[0].mxu0
  %534 = vmatprep.mubr.bf16.mxu0 0
  %535 = vmatmul.mubr.bf16.gmra.mrb[0].mxu0 %v419
  %v536 = vpop.f32.mrb[0].mxu0
  %v537 = vadd.f32 %v444, %v536
  %v538 = vpop.f32.mrb[0].mxu0
  %v539 = vpop.f32.mrb[0].mxu0
  %v540 = vadd.f32 %v444, %v539
  %v541 = vpop.f32.mrb[0].mxu0
  %542 = vmatprep.mubr.bf16.mxu0 0
  %543 = vmatmul.mubr.bf16.gmra.mrb[0].mxu0 %v420
  %v544 = vpop.f32.mrb[0].mxu0
  %v545 = vadd.f32 %v444, %v544
  %v546 = vpop.f32.mrb[0].mxu0
  %v547 = vpop.f32.mrb[0].mxu0
  %v548 = vadd.f32 %v444, %v547
  %v549 = vpop.f32.mrb[0].mxu0
  %550 = vmatprep.mubr.bf16.mxu0 0
  %551 = vmatmul.mubr.bf16.gmra.mrb[0].mxu0 %v421
  %v552 = vpop.f32.mrb[0].mxu0
  %v553 = vadd.f32 %v444, %v552
  %v554 = vpop.f32.mrb[0].mxu0
  %v555 = vpop.f32.mrb[0].mxu0
  %v556 = vadd.f32 %v444, %v555
  %v557 = vpop.f32.mrb[0].mxu0
  %558 = vmatprep.mubr.bf16.mxu0 0
  %559 = vmatmul.mubr.bf16.gmra.mrb[0].mxu0 %v422
  %v560 = vpop.f32.mrb[0].mxu0
  %v561 = vadd.f32 %v444, %v560
  %v562 = vpop.f32.mrb[0].mxu0
  %v563 = vpop.f32.mrb[0].mxu0
  %v564 = vpop.f32.mrb[0].mxu0
  %565 = vdwg.mxu0
  %vm566 = vcmask 23552
  %567 = vst.msk [vmem:[%s7] sm:$0xff] %vm566, %v529
  %568 = vst.msk [vmem:[%s7 + $0x8] sm:$0xff] %vm566, %v532
  %569 = vst.msk [vmem:[%s7 + $0x10] sm:$0xff] %vm566, %v537
  %570 = vst.msk [vmem:[%s7 + $0x18] sm:$0xff] %vm566, %v540
  %571 = vst.msk [vmem:[%s7 + $0x20] sm:$0xff] %vm566, %v545
  %572 = vst.msk [vmem:[%s7 + $0x28] sm:$0xff] %vm566, %v548
  %573 = vst.msk [vmem:[%s7 + $0x30] sm:$0xff] %vm566, %v553
  %574 = vst.msk [vmem:[%s7 + $0x38] sm:$0xff] %vm566, %v556
  %575 = vst.msk [vmem:[%s7 + $0x40] sm:$0xff] %vm566, %v561
  // Predicated region
  $region30: #{decoder_net_forward.1} parent=0 // pred_check
    _
  $region31: #{decoder_net_forward.1} parent=0 // pred_check_branch
    %577 = sbr.rel (0) target = $region33
  $region32: #{decoder_net_forward.1} parent=0 // pred_region
    _
  $region33: #{decoder_net_forward.1} parent=0 // pred_fallthru
    _
  // Predicated region
  $region34: #{decoder_net_forward.1} parent=0 // pred_check
    _
  $region35: #{decoder_net_forward.1} parent=0 // pred_check_branch
    %579 = sbr.rel (0) target = $region37
  $region36: #{decoder_net_forward.1} parent=0 // pred_region
    _
  $region37: #{decoder_net_forward.1} parent=0 // pred_fallthru
    _

</llo_original>
